<compile_context>
chip_gen: v6e
topology: v6e:2x2x1
jax: 0.10.0
libtpu: 0.0.40
codegen_flags: <defaults>
</compile_context>

<pallas_src>
import functools

import jax
import jax.numpy as jnp
from jax import lax
from jax.experimental import pallas as pl
from jax.experimental.pallas import tpu as pltpu

LANES = 128


def _round_up(x, m):
    return ((x + m - 1) // m) * m


def _device_kind():
    try:
        return jax.devices()[0].device_kind.lower()
    except Exception:
        return ""


def _fused_kernel(x_ref, y_ref, out_ref, *, num_rows, tile_rows, chunk_rows,
                  tiles_per_core, n_tiles, needs_mask):
    """Accumulates per-class counts and log-prob sums into out_ref.

    out_ref block is (32, 128):
      rows  0: 8  -> count(y == 0) partials
      rows  8:16  -> count(y == 1) partials
      rows 16:24  -> sum_{y==0} log(1 - sigmoid(x)) partials
      rows 24:32  -> sum_{y==1} log(sigmoid(x)) partials
    """
    @pl.when(pl.program_id(1) == 0)
    def _():
        out_ref[...] = jnp.zeros_like(out_ref)

    # UNclamped global tile id: used to mask both the ragged last tile and the
    # duplicated clamped tile of the 2-way core split.
    tile = pl.program_id(0) * tiles_per_core + pl.program_id(1)
    tile_base = tile * tile_rows
    n_chunks = tile_rows // chunk_rows  # static python int

    def accumulate(masked):
        def chunk_step(ci, carry):
            c0a, c1a, s0a, s1a = carry
            r0 = pl.multiple_of(ci * chunk_rows, chunk_rows)
            x = x_ref[pl.ds(r0, chunk_rows), :].astype(jnp.float32)
            y = y_ref[pl.ds(r0, chunk_rows), :].astype(jnp.float32)
            is0 = y == 0.0
            is1 = y == 1.0
            if masked:
                # (chunk,1) iota, broadcast across lanes by the logical_and.
                rows = (tile_base + r0 +
                        lax.broadcasted_iota(jnp.int32, (chunk_rows, 1), 0))
                valid = rows < num_rows
                is0 = jnp.logical_and(is0, valid)
                is1 = jnp.logical_and(is1, valid)

            # Stable log-sigmoid: 2 EUP transcendentals per element.
            lse = jnp.log1p(jnp.exp(-jnp.abs(x)))
            log_sig = jnp.minimum(x, 0.0) - lse       # log(sigmoid(x))
            log_1m = -jnp.maximum(x, 0.0) - lse       # log(1 - sigmoid(x))

            def fold8(a):  # (chunk_rows,128) -> (8,128): pure VPU adds, no XLU
                return a.reshape(chunk_rows // 8, 8, LANES).sum(axis=0)

            # NOTE: keep jnp.where (true select) -- garbage/NaN x in the
            # unselected branch of invalid rows must NOT propagate.  Do not
            # replace with a multiply-by-mask.
            c0a = c0a + fold8(is0.astype(jnp.float32))
            c1a = c1a + fold8(is1.astype(jnp.float32))
            s0a = s0a + fold8(jnp.where(is0, log_1m, 0.0))
            s1a = s1a + fold8(jnp.where(is1, log_sig, 0.0))
            return c0a, c1a, s0a, s1a

        zero = jnp.zeros((8, LANES), jnp.float32)
        c0a, c1a, s0a, s1a = lax.fori_loop(
            0, n_chunks, chunk_step, (zero, zero, zero, zero), unroll=True)
        # One read-modify-write of the VMEM-resident output block per tile.
        out_ref[0:8, :] += c0a
        out_ref[8:16, :] += c1a
        out_ref[16:24, :] += s0a
        out_ref[24:32, :] += s1a

    if not needs_mask:
        # Every tile of the grid is fully in-bounds: no mask anywhere.
        accumulate(masked=False)
    else:
        @pl.when(tile < n_tiles - 1)
        def _():
            accumulate(masked=False)       # steady-state fast path

        @pl.when(tile >= n_tiles - 1)
        def _():
            accumulate(masked=True)        # ragged last / duplicated tile


def unbalanced_bce_logits_loss(y_pred, y, tile_rows=4096, num_cores=None):
    assert y_pred.shape == y.shape
    n = y_pred.size

    kind = _device_kind()
    is_two_core = ("v7" in kind) or ("tpu7" in kind)   # v7x: 2 TCs per chip
    if num_cores is None:
        num_cores = 2 if is_two_core else 1            # 1 on v5e / v6e

    yp_flat = y_pred.reshape(-1)
    y_flat = y.reshape(-1)
    if y_flat.dtype == jnp.bool_:
        # Widen so the pad value -1 is representable (still only 1 byte/elem).
        y_flat = y_flat.astype(jnp.int8)

    rem = n % LANES
    if rem:  # tiny pad only when needed; padded y = -1 contributes nothing
        pad = LANES - rem
        yp_flat = jnp.pad(yp_flat, (0, pad))
        y_flat = jnp.pad(y_flat, (0, pad), constant_values=-1)

    num_rows = yp_flat.size // LANES
    yp2 = yp_flat.reshape(num_rows, LANES)
    y2 = y_flat.reshape(num_rows, LANES)

    # Sublane alignment for the narrowest input dtype (f32->8, bf16->16, i8->32).
    min_item = min(jnp.dtype(yp2.dtype).itemsize, jnp.dtype(y2.dtype).itemsize)
    row_align = max(8, 32 // max(1, int(min_item)))

    max_tile_rows = max(int(tile_rows), row_align)
    if num_rows <= max_tile_rows:
        t_rows = _round_up(num_rows, row_align)
        chunk = min(512, t_rows)
        t_rows = _round_up(t_rows, chunk)      # chunk must divide t_rows
    else:
        t_rows = _round_up(max_tile_rows, 512)  # default: 4096 rows = 2 MiB f32
        chunk = 512

    n_tiles = pl.cdiv(num_rows, t_rows)
    tiles_per_core = pl.cdiv(n_tiles, num_cores)
    exact = (n_tiles == num_cores * tiles_per_core)
    needs_mask = (num_rows % t_rows != 0) or (not exact)

    if exact:
        def in_map(c, i):
            return (c * tiles_per_core + i, 0)
    else:
        def in_map(c, i):
            # Clamp so the core split never issues an out-of-bounds DMA.  The
            # duplicated step is fully masked in-kernel via the UNclamped row
            # index (and Pallas elides the DMA for a repeated block index).
            return (jnp.minimum(c * tiles_per_core + i, n_tiles - 1), 0)

    in_spec = pl.BlockSpec((t_rows, LANES), in_map)

    # VMEM cap: stay well inside v7x's 64 MiB physical VMEM; v5e/v6e have
    # 128 MiB so allow bigger user-supplied tiles there.
    vmem_limit = (48 if is_two_core else 64) * 1024 * 1024

    out = pl.pallas_call(
        functools.partial(_fused_kernel, num_rows=num_rows, tile_rows=t_rows,
                          chunk_rows=chunk, tiles_per_core=tiles_per_core,
                          n_tiles=n_tiles, needs_mask=needs_mask),
        out_shape=jax.ShapeDtypeStruct((num_cores * 32, LANES), jnp.float32),
        grid_spec=pltpu.PrefetchScalarGridSpec(
            num_scalar_prefetch=0,
            grid=(num_cores, tiles_per_core),
            in_specs=[in_spec, in_spec],
            out_specs=pl.BlockSpec((32, LANES), lambda c, i: (c, 0))),
        compiler_params=pltpu.CompilerParams(
            dimension_semantics=("parallel", "arbitrary"),
            vmem_limit_bytes=vmem_limit),
    )(yp2, y2)

    # Final tiny cross-lane reduce + scalar weight arithmetic in plain JAX.
    parts = out.reshape(num_cores, 4, 8, LANES).sum(axis=(0, 2, 3))
    c0, c1, s0, s1 = parts[0], parts[1], parts[2], parts[3]

    num0 = c0 / (c1 + c0) * 2.0      # mirrors the sequential reassignment in
    num1 = c1 / (c1 + num0) * 2.0    # the torch code (uses the updated num0)
    # weight[y==0] = num1, weight[y==1] = num0; the loss is linear in s0/s1.
    return -(num0 * s1 + num1 * s0) / jnp.float32(n)


# ---------------------------------------------------------------------------
# Pure-JAX reference (mirrors the PyTorch forward exactly).
# ---------------------------------------------------------------------------
def _ref_loss(y_pred, y):
    yp = jax.nn.sigmoid(y_pred.astype(jnp.float32))
    y = y.astype(jnp.float32)
    c0 = jnp.sum(y == 0).astype(jnp.float32)
    c1 = jnp.sum(y == 1).astype(jnp.float32)
    num0 = c0 / (c1 + c0) * 2.0
    num1 = c1 / (c1 + num0) * 2.0
    weight = jnp.where(y == 0, num1, jnp.where(y == 1, num0, 0.0))
    return -jnp.mean((y * jnp.log(yp) + (1.0 - y) * jnp.log(1.0 - yp)) * weight)


if __name__ == "__main__":
    key = jax.random.PRNGKey(0)
    k1, k2 = jax.random.split(key)

    # Small NCHW-like shapes: batch=2, channels=4, spatial=16x16.
    shape = (2, 4, 16, 16)
    y_pred = jax.random.normal(k1, shape, dtype=jnp.float32)
    y = jax.random.bernoulli(k2, p=0.3, shape=shape).astype(jnp.float32)

    loss = jax.block_until_ready(unbalanced_bce_logits_loss(y_pred, y))
    ref = jax.block_until_ready(_ref_loss(y_pred, y))
    assert jnp.allclose(loss, ref, rtol=1e-5, atol=1e-5), (loss, ref)

    print("KERNEL_OK")
</pallas_src>

<mosaic_0001>
module attributes {stable_mosaic.version = 11 : i64} {
  func.func @_fused_kernel(%arg0: i32, %arg1: i32, %arg2: memref<16x128xf32, #tpu.memory_space<vmem>>, %arg3: memref<16x128xf32, #tpu.memory_space<vmem>>, %arg4: memref<32x128xf32, #tpu.memory_space<vmem>>) attributes {dimension_semantics = [#tpu.dimension_semantics<parallel>, #tpu.dimension_semantics<arbitrary>], iteration_bounds = array<i64: 1, 1>, scalar_prefetch = 0 : i64, scratch_operands = 0 : i64, tpu.core_type = #tpu.core_type<tc>, window_params = [{transform_indices = @transform_0, window_bounds = array<i64: 16, 128>}, {transform_indices = @transform_1, window_bounds = array<i64: 16, 128>}, {transform_indices = @transform_2, window_bounds = array<i64: 32, 128>}]} {
    %c0_i32 = arith.constant 0 : i32
    %0 = arith.cmpi eq, %arg1, %c0_i32 : i32
    %1 = arith.extui %0 : i1 to i32
    %c0_i32_0 = arith.constant 0 : i32
    %2 = arith.cmpi ne, %1, %c0_i32_0 : i32
    scf.if %2 {
      %cst_28 = arith.constant 0.000000e+00 : f32
      %59 = vector.broadcast %cst_28 : f32 to vector<32x128xf32>
      %c0_29 = arith.constant 0 : index
      %c0_30 = arith.constant 0 : index
      %60 = vector.load %arg4[%c0_29, %c0_30] : memref<32x128xf32, #tpu.memory_space<vmem>>, vector<32x128xf32>
      tpu.vector_store %arg4[%c0_29, %c0_30], %59 {strides = array<i32>} : memref<32x128xf32, #tpu.memory_space<vmem>>, vector<32x128xf32>,
    } else {
    }
    %cst = arith.constant 0.000000e+00 : f32
    %3 = vector.broadcast %cst : f32 to vector<8x128xf32>
    %c0_i32_1 = arith.constant 0 : i32
    %c16_i32 = arith.constant 16 : i32
    %4 = arith.muli %c0_i32_1, %c16_i32 : i32
    %5 = tpu.assume_multiple %4, 16 : i32
    %6 = arith.index_cast %5 : i32 to index
    %c0 = arith.constant 0 : index
    %7 = vector.load %arg2[%6, %c0] : memref<16x128xf32, #tpu.memory_space<vmem>>, vector<16x128xf32>
    %8 = arith.index_cast %5 : i32 to index
    %c0_2 = arith.constant 0 : index
    %9 = vector.load %arg3[%8, %c0_2] : memref<16x128xf32, #tpu.memory_space<vmem>>, vector<16x128xf32>
    %cst_3 = arith.constant 0.000000e+00 : f32
    %10 = vector.broadcast %cst_3 : f32 to vector<16x128xf32>
    %11 = arith.cmpf oeq, %9, %10 : vector<16x128xf32>
    %cst_4 = arith.constant 1.000000e+00 : f32
    %12 = vector.broadcast %cst_4 : f32 to vector<16x128xf32>
    %13 = arith.cmpf oeq, %9, %12 : vector<16x128xf32>
    %14 = math.absf %7 : vector<16x128xf32>
    %cst_5 = arith.constant 0.000000e+00 : f32
    %15 = vector.broadcast %cst_5 : f32 to vector<16x128xf32>
    %16 = arith.subf %15, %14 : vector<16x128xf32>
    %17 = math.exp %16 : vector<16x128xf32>
    %18 = math.log1p %17 : vector<16x128xf32>
    %cst_6 = arith.constant 0.000000e+00 : f32
    %19 = vector.broadcast %cst_6 : f32 to vector<16x128xf32>
    %20 = arith.minimumf %7, %19 : vector<16x128xf32>
    %21 = arith.subf %20, %18 : vector<16x128xf32>
    %cst_7 = arith.constant 0.000000e+00 : f32
    %22 = vector.broadcast %cst_7 : f32 to vector<16x128xf32>
    %23 = arith.maximumf %7, %22 : vector<16x128xf32>
    %cst_8 = arith.constant 0.000000e+00 : f32
    %24 = vector.broadcast %cst_8 : f32 to vector<16x128xf32>
    %25 = arith.subf %24, %23 : vector<16x128xf32>
    %26 = arith.subf %25, %18 : vector<16x128xf32>
    %27 = arith.extui %11 : vector<16x128xi1> to vector<16x128xi32>
    %28 = arith.sitofp %27 : vector<16x128xi32> to vector<16x128xf32>
    %29 = vector.shape_cast %28 : vector<16x128xf32> to vector<2x8x128xf32>
    %cst_9 = arith.constant dense<0.000000e+00> : vector<8x128xf32>
    %30 = vector.multi_reduction <add>, %29, %cst_9 [0] : vector<2x8x128xf32> to vector<8x128xf32>
    %31 = arith.addf %3, %30 : vector<8x128xf32>
    %32 = arith.extui %13 : vector<16x128xi1> to vector<16x128xi32>
    %33 = arith.sitofp %32 : vector<16x128xi32> to vector<16x128xf32>
    %34 = vector.shape_cast %33 : vector<16x128xf32> to vector<2x8x128xf32>
    %cst_10 = arith.constant dense<0.000000e+00> : vector<8x128xf32>
    %35 = vector.multi_reduction <add>, %34, %cst_10 [0] : vector<2x8x128xf32> to vector<8x128xf32>
    %36 = arith.addf %3, %35 : vector<8x128xf32>
    %cst_11 = arith.constant 0.000000e+00 : f32
    %37 = vector.broadcast %cst_11 : f32 to vector<16x128xf32>
    %38 = arith.select %11, %26, %37 : vector<16x128xi1>, vector<16x128xf32>
    %39 = vector.shape_cast %38 : vector<16x128xf32> to vector<2x8x128xf32>
    %cst_12 = arith.constant dense<0.000000e+00> : vector<8x128xf32>
    %40 = vector.multi_reduction <add>, %39, %cst_12 [0] : vector<2x8x128xf32> to vector<8x128xf32>
    %41 = arith.addf %3, %40 : vector<8x128xf32>
    %cst_13 = arith.constant 0.000000e+00 : f32
    %42 = vector.broadcast %cst_13 : f32 to vector<16x128xf32>
    %43 = arith.select %13, %21, %42 : vector<16x128xi1>, vector<16x128xf32>
    %44 = vector.shape_cast %43 : vector<16x128xf32> to vector<2x8x128xf32>
    %cst_14 = arith.constant dense<0.000000e+00> : vector<8x128xf32>
    %45 = vector.multi_reduction <add>, %44, %cst_14 [0] : vector<2x8x128xf32> to vector<8x128xf32>
    %46 = arith.addf %3, %45 : vector<8x128xf32>
    %c1_i32 = arith.constant 1 : i32
    %c0_15 = arith.constant 0 : index
    %c0_16 = arith.constant 0 : index
    %47 = vector.load %arg4[%c0_15, %c0_16] : memref<32x128xf32, #tpu.memory_space<vmem>>, vector<8x128xf32>
    %48 = arith.addf %47, %31 : vector<8x128xf32>
    %c0_17 = arith.constant 0 : index
    %c0_18 = arith.constant 0 : index
    %49 = vector.load %arg4[%c0_17, %c0_18] : memref<32x128xf32, #tpu.memory_space<vmem>>, vector<8x128xf32>
    tpu.vector_store %arg4[%c0_17, %c0_18], %48 {strides = array<i32>} : memref<32x128xf32, #tpu.memory_space<vmem>>, vector<8x128xf32>,
    %c8 = arith.constant 8 : index
    %c0_19 = arith.constant 0 : index
    %50 = vector.load %arg4[%c8, %c0_19] : memref<32x128xf32, #tpu.memory_space<vmem>>, vector<8x128xf32>
    %51 = arith.addf %50, %36 : vector<8x128xf32>
    %c8_20 = arith.constant 8 : index
    %c0_21 = arith.constant 0 : index
    %52 = vector.load %arg4[%c8_20, %c0_21] : memref<32x128xf32, #tpu.memory_space<vmem>>, vector<8x128xf32>
    tpu.vector_store %arg4[%c8_20, %c0_21], %51 {strides = array<i32>} : memref<32x128xf32, #tpu.memory_space<vmem>>, vector<8x128xf32>,
    %c16 = arith.constant 16 : index
    %c0_22 = arith.constant 0 : index
    %53 = vector.load %arg4[%c16, %c0_22] : memref<32x128xf32, #tpu.memory_space<vmem>>, vector<8x128xf32>
    %54 = arith.addf %53, %41 : vector<8x128xf32>
    %c16_23 = arith.constant 16 : index
    %c0_24 = arith.constant 0 : index
    %55 = vector.load %arg4[%c16_23, %c0_24] : memref<32x128xf32, #tpu.memory_space<vmem>>, vector<8x128xf32>
    tpu.vector_store %arg4[%c16_23, %c0_24], %54 {strides = array<i32>} : memref<32x128xf32, #tpu.memory_space<vmem>>, vector<8x128xf32>,
    %c24 = arith.constant 24 : index
    %c0_25 = arith.constant 0 : index
    %56 = vector.load %arg4[%c24, %c0_25] : memref<32x128xf32, #tpu.memory_space<vmem>>, vector<8x128xf32>
    %57 = arith.addf %56, %46 : vector<8x128xf32>
    %c24_26 = arith.constant 24 : index
    %c0_27 = arith.constant 0 : index
    %58 = vector.load %arg4[%c24_26, %c0_27] : memref<32x128xf32, #tpu.memory_space<vmem>>, vector<8x128xf32>
    tpu.vector_store %arg4[%c24_26, %c0_27], %57 {strides = array<i32>} : memref<32x128xf32, #tpu.memory_space<vmem>>, vector<8x128xf32>,
    return
  }
  func.func @transform_0(%arg0: i32, %arg1: i32) -> (i32, i32) {
    %c1_i32 = arith.constant 1 : i32
    %0 = arith.muli %arg0, %c1_i32 : i32
    %1 = arith.addi %0, %arg1 : i32
    %c0_i32 = arith.constant 0 : i32
    %c0_i32_0 = arith.constant 0 : i32
    return %1, %c0_i32 : i32, i32
  }
  func.func @transform_1(%arg0: i32, %arg1: i32) -> (i32, i32) {
    %c1_i32 = arith.constant 1 : i32
    %0 = arith.muli %arg0, %c1_i32 : i32
    %1 = arith.addi %0, %arg1 : i32
    %c0_i32 = arith.constant 0 : i32
    %c0_i32_0 = arith.constant 0 : i32
    return %1, %c0_i32 : i32, i32
  }
  func.func @transform_2(%arg0: i32, %arg1: i32) -> (i32, i32) {
    %c0_i32 = arith.constant 0 : i32
    %c0_i32_0 = arith.constant 0 : i32
    return %arg0, %c0_i32 : i32, i32
  }
}

</mosaic_0001>

<llo_original>
// kernel: tpu_custom_call.1
$region0: #{tpu_custom_call.1}
  #allocation0 [shape = 'u32[]', space=smem, size = 0x4, offset = 0x4, fixed_abs, tag = 'smem constant byte address 0x4 - core index']
  #allocation1 [shape = 'u32[144,128]{1,0:T(1,128)}', space=vmem, size = 0x12000, scoped, tag = 'internal scratch']
  %s0 = inlined_call_operand.hbm [shape: f32[16,128], index: 0, kind: input, shape index: {}]
  %s1 = inlined_call_operand.hbm [shape: f32[16,128], index: 1, kind: input, shape index: {}]
  %s2 = inlined_call_operand.hbm [shape: f32[32,128], index: 2, kind: output, shape index: {}]
  %s3 = sld [smem:[#allocation0]]
  $region30: #{tpu_custom_call.1} parent=0
    _
  %s5 = ssub.s32 1, %s3
  %s6 = scalar_select 0, %s5, %s3
  $region1: #{tpu_custom_call.1} parent=0
    #allocation2 [shape = 'u8[8192]{0}', space=vmem, size = 0x2000, scoped, tag = 'input window, operand 0, single buffered']
    #allocation3 [shape = 's32[1]{0}', space=sflag, size = 0x4, scoped, tag = 'scoped memory for tpu_custom_call.1']
    #allocation4 [shape = 's32[1]{0}', space=sflag, size = 0x4, scoped, tag = 'scoped memory for tpu_custom_call.1']
    #allocation5 [shape = 'u8[8192]{0}', space=vmem, size = 0x2000, scoped, tag = 'input window, operand 1, single buffered']
    #allocation6 [shape = 's32[1]{0}', space=sflag, size = 0x4, scoped, tag = 'scoped memory for tpu_custom_call.1']
    #allocation7 [shape = 'u8[16384]{0}', space=vmem, size = 0x4000, scoped, tag = 'output window, operand 0, single buffered']
    %7 = vsyncpa [#allocation3], 0
    %8 = vsyncpa [#allocation6], 0
    %9 = vsyncpa [#allocation4], 0
    // Predicated region
    $region2: #{tpu_custom_call.1} parent=1 // pred_check
      _
    $region3: #{tpu_custom_call.1} parent=1 // pred_check_branch
      %11 = sbr.rel (0) target = $region5
    $region4: #{tpu_custom_call.1} parent=1 // pred_region
      %s12 = sadd.s32 0, 0
      %s13 = smul.u32 2, %s12
      %s15 = ssub.s32 256, 256
      %16 = vsyncadd [#allocation3], %s15
      %s17 = smul.addr %s13, 128
      %s18 = scalar_lea.hbm %s0, %s17
      %s19 = sshll.u32 [#allocation2], 4
      %s20 = int_to_ptr.vmem [resolvable:$true] %s19
      %25 = dma.hbm_to_vmem [thread:$0]  %s18, 256, %s20, [#allocation3], 128, 128, 8
    $region5: #{tpu_custom_call.1} parent=1 // pred_fallthru
      _
    // Predicated region
    $region6: #{tpu_custom_call.1} parent=1 // pred_check
      _
    $region7: #{tpu_custom_call.1} parent=1 // pred_check_branch
      %27 = sbr.rel (0) target = $region9
    $region8: #{tpu_custom_call.1} parent=1 // pred_region
      %s28 = sadd.s32 0, 0
      %s29 = smul.u32 2, %s28
      %s31 = ssub.s32 256, 256
      %32 = vsyncadd [#allocation6], %s31
      %s33 = smul.addr %s29, 128
      %s34 = scalar_lea.hbm %s1, %s33
      %s35 = sshll.u32 [#allocation5], 4
      %s36 = int_to_ptr.vmem [resolvable:$true] %s35
      %41 = dma.hbm_to_vmem [thread:$0]  %s34, 256, %s36, [#allocation6], 128, 128, 8
    $region9: #{tpu_custom_call.1} parent=1 // pred_fallthru
      _
    // Predicated region
    $region10: #{tpu_custom_call.1} parent=1 // pred_check
      _
    $region11: #{tpu_custom_call.1} parent=1 // pred_check_branch
      %43 = sbr.rel (0) target = $region13
    $region12: #{tpu_custom_call.1} parent=1 // pred_region
      %44 = dma.done [#allocation3], 256
    $region13: #{tpu_custom_call.1} parent=1 // pred_fallthru
      _
    // Predicated region
    $region14: #{tpu_custom_call.1} parent=1 // pred_check
      _
    $region15: #{tpu_custom_call.1} parent=1 // pred_check_branch
      %46 = sbr.rel (0) target = $region17
    $region16: #{tpu_custom_call.1} parent=1 // pred_region
      %47 = dma.done [#allocation6], 256
    $region17: #{tpu_custom_call.1} parent=1 // pred_fallthru
      _
    %s48 = sadd.s32 0, 0
    %s49 = smul.u32 2, %s48
    %s50 = sadd.s32 0, 0
    %s51 = smul.u32 2, %s50
    %p52 = scmp.eq.s32.totalorder 0, 0
    // Predicated region
    $region18: #{tpu_custom_call.1} parent=1 // pred_check
      %p53 = pneg %p52
    $region19: #{tpu_custom_call.1} parent=1 // pred_check_branch
      %55 = sbr.rel (%p53) target = $region21
    $region20: #{tpu_custom_call.1} parent=1 // pred_region
      %56 = vst [vmem:[#allocation7] sm:$0xff] 0.0
      %57 = vst [vmem:[#allocation7 + $0x8] sm:$0xff] 0.0
      %58 = vst [vmem:[#allocation7 + $0x10] sm:$0xff] 0.0
      %59 = vst [vmem:[#allocation7 + $0x18] sm:$0xff] 0.0
    $region21: #{tpu_custom_call.1} parent=1 // pred_fallthru
      _
    %v60 = vld [vmem:[#allocation2] sm:$0xff]
    %v61 = vld [vmem:[#allocation2 + $0x8] sm:$0xff]
    %v62 = vld [vmem:[#allocation5] sm:$0xff]
    %v63 = vld [vmem:[#allocation5 + $0x8] sm:$0xff]
    %vm64 = vcmp.eq.f32.partialorder %v62, 0.0
    %vm65 = vcmp.eq.f32.partialorder %v63, 0.0
    %vm66 = vcmp.eq.f32.partialorder %v62, 1.0
    %vm67 = vcmp.eq.f32.partialorder %v63, 1.0
    %v68 = vand.u32 2147483647, %v60
    %v69 = vand.u32 2147483647, %v61
    %v70 = vsub.f32 0.0, %v68
    %v71 = vsub.f32 0.0, %v69
    %v72 = vmul.f32 %v70, 1.442695
    %v73 = vpow.pop %v72
    %v74 = vmul.f32 %v71, 1.442695
    %v75 = vpow.pop %v74
    %v76 = vadd.f32 %v73, 1.0
    %v77 = vlog2.pop %v76
    %v78 = vmul.f32 %v77, 0.6931472
    %v79 = vmul.f32 -0.5, %v73
    %v80 = vadd.f32 %v79, 1.0
    %v81 = vmul.f32 %v80, %v73
    %v82 = vand.u32 2147483647, %v73
    %vm83 = vcmp.lt.f32.partialorder %v82, 0.0004427343
    %v84 = vsel %vm83, %v81, %v78
    %v85 = vadd.f32 %v75, 1.0
    %v86 = vlog2.pop %v85
    %v87 = vmul.f32 %v86, 0.6931472
    %v88 = vmul.f32 -0.5, %v75
    %v89 = vadd.f32 %v88, 1.0
    %v90 = vmul.f32 %v89, %v75
    %v91 = vand.u32 2147483647, %v75
    %vm92 = vcmp.lt.f32.partialorder %v91, 0.0004427343
    %v93 = vsel %vm92, %v90, %v87
    %v94 = vmin.f32 %v60, 0.0
    %v95 = vmin.f32 %v61, 0.0
    %v96 = vsub.f32 %v94, %v84
    %v97 = vsub.f32 %v95, %v93
    %v98 = vmax.f32 %v60, 0.0
    %v99 = vmax.f32 %v61, 0.0
    %v100 = vsub.f32 0.0, %v98
    %v101 = vsub.f32 0.0, %v99
    %v102 = vsub.f32 %v100, %v84
    %v103 = vsub.f32 %v101, %v93
    %v104 = vsel %vm64, 1, 0
    %v105 = vsel %vm65, 1, 0
    %v106 = vcvt.s32.f32 %v104
    %v107 = vcvt.s32.f32 %v105
    %v108 = vadd.f32 %v106, %v107
    %v109 = vadd.f32 %v108, 0.0
    %v110 = vsel %vm66, 1, 0
    %v111 = vsel %vm67, 1, 0
    %v112 = vcvt.s32.f32 %v110
    %v113 = vcvt.s32.f32 %v111
    %v114 = vadd.f32 %v112, %v113
    %v115 = vadd.f32 %v114, 0.0
    %v116 = vsel %vm64, %v102, 0.0
    %v117 = vsel %vm65, %v103, 0.0
    %v118 = vadd.f32 %v116, %v117
    %v119 = vadd.f32 %v118, 0.0
    %v120 = vsel %vm66, %v96, 0.0
    %v121 = vsel %vm67, %v97, 0.0
    %v122 = vadd.f32 %v120, %v121
    %v123 = vadd.f32 %v122, 0.0
    %v124 = vld [vmem:[#allocation7] sm:$0xff]
    %v125 = vadd.f32 %v124, %v109
    %126 = vst [vmem:[#allocation7] sm:$0xff] %v125
    %v127 = vld [vmem:[#allocation7 + $0x8] sm:$0xff]
    %v128 = vadd.f32 %v127, %v115
    %129 = vst [vmem:[#allocation7 + $0x8] sm:$0xff] %v128
    %v130 = vld [vmem:[#allocation7 + $0x10] sm:$0xff]
    %v131 = vadd.f32 %v130, %v119
    %132 = vst [vmem:[#allocation7 + $0x10] sm:$0xff] %v131
    %v133 = vld [vmem:[#allocation7 + $0x18] sm:$0xff]
    %v134 = vadd.f32 %v133, %v123
    %135 = vst [vmem:[#allocation7 + $0x18] sm:$0xff] %v134
    // Predicated region
    $region22: #{tpu_custom_call.1} parent=1 // pred_check
      _
    $region23: #{tpu_custom_call.1} parent=1 // pred_check_branch
      %137 = sbr.rel (0) target = $region25
    $region24: #{tpu_custom_call.1} parent=1 // pred_region
      %s139 = ssub.s32 512, 512
      %140 = vsyncadd [#allocation4], %s139
      %s141 = sshll.u32 [#allocation7], 4
      %s142 = int_to_ptr.vmem [resolvable:$true] %s141
      %147 = dma.vmem_to_hbm [thread:$0]  %s142, 512, %s2, [#allocation4], 128, 128, 8
    $region25: #{tpu_custom_call.1} parent=1 // pred_fallthru
      _
    // Predicated region
    $region26: #{tpu_custom_call.1} parent=1 // pred_check
      _
    $region27: #{tpu_custom_call.1} parent=1 // pred_check_branch
      %149 = sbr.rel (0) target = $region29
    $region28: #{tpu_custom_call.1} parent=1 // pred_region
      %150 = dma.done [#allocation4], 512
    $region29: #{tpu_custom_call.1} parent=1 // pred_fallthru
      _
    %151 = vsyncpa [#allocation3], 1
    %152 = vsyncpa [#allocation6], 1
    %153 = vsyncpa [#allocation4], 1

</llo_original>
